<compile_context>
chip_gen: v7x
topology: tpu7x:2x2x1
jax: 0.10.0
libtpu: 0.0.40
codegen_flags: <defaults>
</compile_context>

<pallas_src>
import functools

import jax
import jax.numpy as jnp
from jax.experimental import pallas as pl
from jax.experimental.pallas import tpu as pltpu


def _round_up(x, m):
    return (x + m - 1) // m * m


# -----------------------------------------------------------------------------
# Pallas kernel
# -----------------------------------------------------------------------------
def _actor_kernel(log_std_min, log_std_max, lg,
                  obs_ref,
                  w1_ref, b1_ref,
                  w2_ref, b2_ref,
                  w3_ref, b3_ref,
                  out_ref):
    x = obs_ref[...]

    # trunk: Linear -> ReLU -> Linear -> ReLU  (bf16 MXU inputs, f32 accumulate)
    h = jnp.dot(x, w1_ref[...], preferred_element_type=jnp.float32) + b1_ref[...]
    h = jnp.maximum(h, 0.0)
    h = jnp.dot(h.astype(w2_ref.dtype), w2_ref[...],
                preferred_element_type=jnp.float32) + b2_ref[...]
    h = jnp.maximum(h, 0.0)

    # fused, lane-packed head matmul -> [TB, 2*LG]; split at a vreg boundary
    head = jnp.dot(h.astype(w3_ref.dtype), w3_ref[...],
                   preferred_element_type=jnp.float32) + b3_ref[...]
    mu = head[:, :lg]          # lane-group 0
    log_std = head[:, lg:]     # lane-group 1

    # log_std = tanh(log_std) rescaled to [log_std_min, log_std_max]; std = exp
    log_std = jnp.tanh(log_std)
    log_std = log_std_min + 0.5 * (log_std_max - log_std_min) * (log_std + 1.0)
    std = jnp.exp(log_std)

    # lane-dense writeback: three 128-lane-aligned groups, no masked stores
    out_ref[:, :lg] = mu
    out_ref[:, lg:2 * lg] = std
    out_ref[:, 2 * lg:] = jnp.tanh(mu)


# -----------------------------------------------------------------------------
# Wrapper
# -----------------------------------------------------------------------------
def diag_gaussian_actor_forward(obs, params, log_std_bounds, action_dim, *,
                                block_b=1024):
    """Returns (mu, std, tanh(mu)) — the parameters / mean of SquashedNormal."""
    B, obs_dim = obs.shape
    K, H = params["w1"].shape
    assert K == obs_dim, "w1 must be [obs_dim, hidden]"
    lg = params["w3"].shape[1] // 2          # lane-group width (>= action_dim)
    log_std_min, log_std_max = (float(v) for v in log_std_bounds)
    compute_dtype = params["w1"].dtype

    # batch tile: multiple of 8 sublanes, capped at block_b; for large batches
    # cap at ceil(B/2) so the grid has >=2 steps (both v7x TensorCores active)
    B8 = _round_up(B, 8)
    TB = min(block_b, B8)
    if B8 > 8:
        TB = min(TB, _round_up((B8 + 1) // 2, 8))
    Bp = _round_up(B, TB)

    obs_c = obs.astype(compute_dtype)
    obs_p = obs_c if Bp == B else jnp.pad(obs_c, ((0, Bp - B), (0, 0)))

    kernel = functools.partial(_actor_kernel, log_std_min, log_std_max, lg)

    flops = 2 * Bp * (obs_dim * H + H * H + H * 2 * lg)
    transcendentals = 3 * Bp * lg
    bytes_accessed = (obs_p.size * obs_p.dtype.itemsize
                      + sum(int(p.size) * p.dtype.itemsize
                            for p in params.values())
                      + Bp * 3 * lg * 4)

    out = pl.pallas_call(
        kernel,
        out_shape=jax.ShapeDtypeStruct((Bp, 3 * lg), jnp.float32),
        grid_spec=pl.GridSpec(
            grid=(Bp // TB,),
            in_specs=[
                pl.BlockSpec((TB, obs_dim), lambda i: (i, 0)),   # obs streams
                pl.BlockSpec((obs_dim, H), lambda i: (0, 0)),    # weights resident
                pl.BlockSpec((1, H), lambda i: (0, 0)),
                pl.BlockSpec((H, H), lambda i: (0, 0)),
                pl.BlockSpec((1, H), lambda i: (0, 0)),
                pl.BlockSpec((H, 2 * lg), lambda i: (0, 0)),
                pl.BlockSpec((1, 2 * lg), lambda i: (0, 0)),
            ],
            out_specs=pl.BlockSpec((TB, 3 * lg), lambda i: (i, 0)),
        ),
        compiler_params=pltpu.CompilerParams(
            dimension_semantics=("parallel",)),
        cost_estimate=pl.CostEstimate(flops=flops,
                                      transcendentals=transcendentals,
                                      bytes_accessed=bytes_accessed),
    )(obs_p,
      params["w1"], params["b1"],
      params["w2"], params["b2"],
      params["w3"], params["b3"])

    mu = out[:B, :action_dim]
    std = out[:B, lg:lg + action_dim]
    mean = out[:B, 2 * lg:2 * lg + action_dim]
    return mu, std, mean


# -----------------------------------------------------------------------------
# Deterministic parameter init (matches orthogonal_init_: orthogonal W, zero b)
# Weights stored transposed ([in, out]) so the kernel does x @ W + b.
# The head weight is lane-packed into [hidden, 2*LG]: mu columns occupy lanes
# 0..A-1 of group 0, log_std columns occupy lanes 0..A-1 of group 1 (LG = 128
# for small A); unused lanes are zero.
# -----------------------------------------------------------------------------
def init_params(key, obs_dim, hidden_dim, action_dim, *,
                compute_dtype=jnp.bfloat16):
    k1, k2, k3 = jax.random.split(key, 3)
    orth = jax.nn.initializers.orthogonal()
    # PyTorch Linear weight is [out, in]; we store transposed [in, out].
    w1 = orth(k1, (hidden_dim, obs_dim), jnp.float32).T
    w2 = orth(k2, (hidden_dim, hidden_dim), jnp.float32).T
    w3 = orth(k3, (2 * action_dim, hidden_dim), jnp.float32).T   # [hidden, 2A]

    lg = _round_up(action_dim, 128)
    w3p = jnp.zeros((hidden_dim, 2 * lg), jnp.float32)
    w3p = w3p.at[:, :action_dim].set(w3[:, :action_dim])
    w3p = w3p.at[:, lg:lg + action_dim].set(w3[:, action_dim:])

    return {
        "w1": w1.astype(compute_dtype),
        "b1": jnp.zeros((1, hidden_dim), jnp.float32),
        "w2": w2.astype(compute_dtype),
        "b2": jnp.zeros((1, hidden_dim), jnp.float32),
        "w3": w3p.astype(compute_dtype),
        "b3": jnp.zeros((1, 2 * lg), jnp.float32),
    }


# -----------------------------------------------------------------------------
# Pure-JAX reference (mirrors the kernel numerics: bf16 MXU inputs, f32 accum)
# -----------------------------------------------------------------------------
def reference_forward(obs, params, log_std_bounds, action_dim):
    cd = params["w1"].dtype
    lg = params["w3"].shape[1] // 2
    x = obs.astype(cd)
    h = jnp.dot(x, params["w1"], preferred_element_type=jnp.float32) + params["b1"]
    h = jnp.maximum(h, 0.0)
    h = jnp.dot(h.astype(cd), params["w2"],
                preferred_element_type=jnp.float32) + params["b2"]
    h = jnp.maximum(h, 0.0)
    head = jnp.dot(h.astype(cd), params["w3"],
                   preferred_element_type=jnp.float32) + params["b3"]
    mu = head[:, :action_dim]
    log_std = head[:, lg:lg + action_dim]
    log_std = jnp.tanh(log_std)
    lo, hi = log_std_bounds
    log_std = lo + 0.5 * (hi - lo) * (log_std + 1.0)
    return mu, jnp.exp(log_std), jnp.tanh(mu)


if __name__ == "__main__":
    # Small shapes consistent with the module (args.hidden_depth = 2).
    batch, obs_dim, hidden_dim, action_dim = 8, 32, 256, 8
    log_std_bounds = (-5.0, 2.0)

    key = jax.random.PRNGKey(0)
    k_obs, k_par = jax.random.split(key)
    obs = jax.random.normal(k_obs, (batch, obs_dim), dtype=jnp.float32)
    params = init_params(k_par, obs_dim, hidden_dim, action_dim)

    mu, std, mean = diag_gaussian_actor_forward(obs, params, log_std_bounds,
                                                action_dim)
    jax.block_until_ready((mu, std, mean))

    mu_ref, std_ref, mean_ref = reference_forward(obs, params, log_std_bounds,
                                                  action_dim)
    assert jnp.allclose(mu, mu_ref, atol=2e-3, rtol=2e-3)
    assert jnp.allclose(std, std_ref, atol=2e-3, rtol=2e-3)
    assert jnp.allclose(mean, mean_ref, atol=2e-3, rtol=2e-3)

    # TODO(synk): dist.rsample()/log_prob (the stochastic TransformedDistribution
    # machinery) is not part of forward(); only the distribution parameters and
    # mean are computed here.
    print("KERNEL_OK")
</pallas_src>

<mosaic_0001>
module attributes {stable_mosaic.version = 11 : i64} {
  func.func @_actor_kernel(%arg0: i32, %arg1: memref<8x32xbf16, #tpu.memory_space<vmem>>, %arg2: memref<32x256xbf16, #tpu.memory_space<vmem>>, %arg3: memref<1x256xf32, #tpu.memory_space<vmem>>, %arg4: memref<256x256xbf16, #tpu.memory_space<vmem>>, %arg5: memref<1x256xf32, #tpu.memory_space<vmem>>, %arg6: memref<256x256xbf16, #tpu.memory_space<vmem>>, %arg7: memref<1x256xf32, #tpu.memory_space<vmem>>, %arg8: memref<8x384xf32, #tpu.memory_space<vmem>>) attributes {dimension_semantics = [#tpu.dimension_semantics<parallel>], iteration_bounds = array<i64: 1>, scalar_prefetch = 0 : i64, scratch_operands = 0 : i64, tpu.core_type = #tpu.core_type<tc>, window_params = [{transform_indices = @transform_0, window_bounds = array<i64: 8, 32>}, {pipeline_mode = #tpu.pipeline_mode<synchronous>, transform_indices = @transform_1, window_bounds = array<i64: 32, 256>}, {pipeline_mode = #tpu.pipeline_mode<synchronous>, transform_indices = @transform_2, window_bounds = array<i64: 1, 256>}, {pipeline_mode = #tpu.pipeline_mode<synchronous>, transform_indices = @transform_3, window_bounds = array<i64: 256, 256>}, {pipeline_mode = #tpu.pipeline_mode<synchronous>, transform_indices = @transform_4, window_bounds = array<i64: 1, 256>}, {pipeline_mode = #tpu.pipeline_mode<synchronous>, transform_indices = @transform_5, window_bounds = array<i64: 256, 256>}, {pipeline_mode = #tpu.pipeline_mode<synchronous>, transform_indices = @transform_6, window_bounds = array<i64: 1, 256>}, {transform_indices = @transform_7, window_bounds = array<i64: 8, 384>}]} {
    %c0 = arith.constant 0 : index
    %c0_0 = arith.constant 0 : index
    %0 = vector.load %arg1[%c0, %c0_0] : memref<8x32xbf16, #tpu.memory_space<vmem>>, vector<8x32xbf16>
    %c0_1 = arith.constant 0 : index
    %c0_2 = arith.constant 0 : index
    %1 = vector.load %arg2[%c0_1, %c0_2] : memref<32x256xbf16, #tpu.memory_space<vmem>>, vector<32x256xbf16>
    %cst = arith.constant dense<0.000000e+00> : vector<8x256xf32>
    %2 = tpu.matmul %0, %1, %cst {dimension_numbers = #tpu.dot_dimension_numbers<[1], [0], [0], [1], [0, 0, 1, 1], [], []>} : vector<8x32xbf16>, vector<32x256xbf16>, vector<8x256xf32> -> vector<8x256xf32>
    %c0_3 = arith.constant 0 : index
    %c0_4 = arith.constant 0 : index
    %3 = vector.load %arg3[%c0_3, %c0_4] : memref<1x256xf32, #tpu.memory_space<vmem>>, vector<1x256xf32>
    %4 = vector.broadcast %3 : vector<1x256xf32> to vector<8x256xf32>
    %5 = arith.addf %2, %4 : vector<8x256xf32>
    %cst_5 = arith.constant 0.000000e+00 : f32
    %6 = vector.broadcast %cst_5 : f32 to vector<8x256xf32>
    %7 = arith.maximumf %5, %6 : vector<8x256xf32>
    %8 = arith.truncf %7 : vector<8x256xf32> to vector<8x256xbf16>
    %c0_6 = arith.constant 0 : index
    %c0_7 = arith.constant 0 : index
    %9 = vector.load %arg4[%c0_6, %c0_7] : memref<256x256xbf16, #tpu.memory_space<vmem>>, vector<256x256xbf16>
    %cst_8 = arith.constant dense<0.000000e+00> : vector<8x256xf32>
    %10 = tpu.matmul %8, %9, %cst_8 {dimension_numbers = #tpu.dot_dimension_numbers<[1], [0], [0], [1], [0, 0, 1, 1], [], []>} : vector<8x256xbf16>, vector<256x256xbf16>, vector<8x256xf32> -> vector<8x256xf32>
    %c0_9 = arith.constant 0 : index
    %c0_10 = arith.constant 0 : index
    %11 = vector.load %arg5[%c0_9, %c0_10] : memref<1x256xf32, #tpu.memory_space<vmem>>, vector<1x256xf32>
    %12 = vector.broadcast %11 : vector<1x256xf32> to vector<8x256xf32>
    %13 = arith.addf %10, %12 : vector<8x256xf32>
    %cst_11 = arith.constant 0.000000e+00 : f32
    %14 = vector.broadcast %cst_11 : f32 to vector<8x256xf32>
    %15 = arith.maximumf %13, %14 : vector<8x256xf32>
    %16 = arith.truncf %15 : vector<8x256xf32> to vector<8x256xbf16>
    %c0_12 = arith.constant 0 : index
    %c0_13 = arith.constant 0 : index
    %17 = vector.load %arg6[%c0_12, %c0_13] : memref<256x256xbf16, #tpu.memory_space<vmem>>, vector<256x256xbf16>
    %cst_14 = arith.constant dense<0.000000e+00> : vector<8x256xf32>
    %18 = tpu.matmul %16, %17, %cst_14 {dimension_numbers = #tpu.dot_dimension_numbers<[1], [0], [0], [1], [0, 0, 1, 1], [], []>} : vector<8x256xbf16>, vector<256x256xbf16>, vector<8x256xf32> -> vector<8x256xf32>
    %c0_15 = arith.constant 0 : index
    %c0_16 = arith.constant 0 : index
    %19 = vector.load %arg7[%c0_15, %c0_16] : memref<1x256xf32, #tpu.memory_space<vmem>>, vector<1x256xf32>
    %20 = vector.broadcast %19 : vector<1x256xf32> to vector<8x256xf32>
    %21 = arith.addf %18, %20 : vector<8x256xf32>
    %22 = vector.extract_strided_slice %21 {offsets = [0, 0], sizes = [8, 128], strides = [1, 1]} : vector<8x256xf32> to vector<8x128xf32>
    %23 = vector.extract_strided_slice %21 {offsets = [0, 128], sizes = [8, 128], strides = [1, 1]} : vector<8x256xf32> to vector<8x128xf32>
    %24 = math.tanh %23 : vector<8x128xf32>
    %cst_17 = arith.constant 1.000000e+00 : f32
    %25 = vector.broadcast %cst_17 : f32 to vector<8x128xf32>
    %26 = arith.addf %24, %25 : vector<8x128xf32>
    %cst_18 = arith.constant 3.500000e+00 : f32
    %27 = vector.broadcast %cst_18 : f32 to vector<8x128xf32>
    %28 = arith.mulf %27, %26 : vector<8x128xf32>
    %cst_19 = arith.constant -5.000000e+00 : f32
    %29 = vector.broadcast %cst_19 : f32 to vector<8x128xf32>
    %30 = arith.addf %29, %28 : vector<8x128xf32>
    %31 = math.exp %30 : vector<8x128xf32>
    %c0_20 = arith.constant 0 : index
    %c0_21 = arith.constant 0 : index
    %32 = vector.load %arg8[%c0_20, %c0_21] : memref<8x384xf32, #tpu.memory_space<vmem>>, vector<8x128xf32>
    tpu.vector_store %arg8[%c0_20, %c0_21], %22 {strides = array<i32>} : memref<8x384xf32, #tpu.memory_space<vmem>>, vector<8x128xf32>,
    %c0_22 = arith.constant 0 : index
    %c128 = arith.constant 128 : index
    %33 = vector.load %arg8[%c0_22, %c128] : memref<8x384xf32, #tpu.memory_space<vmem>>, vector<8x128xf32>
    tpu.vector_store %arg8[%c0_22, %c128], %31 {strides = array<i32>} : memref<8x384xf32, #tpu.memory_space<vmem>>, vector<8x128xf32>,
    %34 = math.tanh %22 : vector<8x128xf32>
    %c0_23 = arith.constant 0 : index
    %c256 = arith.constant 256 : index
    %35 = vector.load %arg8[%c0_23, %c256] : memref<8x384xf32, #tpu.memory_space<vmem>>, vector<8x128xf32>
    tpu.vector_store %arg8[%c0_23, %c256], %34 {strides = array<i32>} : memref<8x384xf32, #tpu.memory_space<vmem>>, vector<8x128xf32>,
    return
  }
  func.func @transform_0(%arg0: i32) -> (i32, i32) {
    %c0_i32 = arith.constant 0 : i32
    %c0_i32_0 = arith.constant 0 : i32
    return %arg0, %c0_i32 : i32, i32
  }
  func.func @transform_1(%arg0: i32) -> (i32, i32) {
    %c0_i32 = arith.constant 0 : i32
    %c0_i32_0 = arith.constant 0 : i32
    %c0_i32_1 = arith.constant 0 : i32
    return %c0_i32, %c0_i32_0 : i32, i32
  }
  func.func @transform_2(%arg0: i32) -> (i32, i32) {
    %c0_i32 = arith.constant 0 : i32
    %c0_i32_0 = arith.constant 0 : i32
    %c0_i32_1 = arith.constant 0 : i32
    return %c0_i32, %c0_i32_0 : i32, i32
  }
  func.func @transform_3(%arg0: i32) -> (i32, i32) {
    %c0_i32 = arith.constant 0 : i32
    %c0_i32_0 = arith.constant 0 : i32
    %c0_i32_1 = arith.constant 0 : i32
    return %c0_i32, %c0_i32_0 : i32, i32
  }
  func.func @transform_4(%arg0: i32) -> (i32, i32) {
    %c0_i32 = arith.constant 0 : i32
    %c0_i32_0 = arith.constant 0 : i32
    %c0_i32_1 = arith.constant 0 : i32
    return %c0_i32, %c0_i32_0 : i32, i32
  }
  func.func @transform_5(%arg0: i32) -> (i32, i32) {
    %c0_i32 = arith.constant 0 : i32
    %c0_i32_0 = arith.constant 0 : i32
    %c0_i32_1 = arith.constant 0 : i32
    return %c0_i32, %c0_i32_0 : i32, i32
  }
  func.func @transform_6(%arg0: i32) -> (i32, i32) {
    %c0_i32 = arith.constant 0 : i32
    %c0_i32_0 = arith.constant 0 : i32
    %c0_i32_1 = arith.constant 0 : i32
    return %c0_i32, %c0_i32_0 : i32, i32
  }
  func.func @transform_7(%arg0: i32) -> (i32, i32) {
    %c0_i32 = arith.constant 0 : i32
    %c0_i32_0 = arith.constant 0 : i32
    return %arg0, %c0_i32 : i32, i32
  }
}

</mosaic_0001>

<llo_original>
// kernel: tpu_custom_call.1
$region0: #{tpu_custom_call.1}
  #allocation0 [shape = 'u32[]', space=smem, size = 0x4, offset = 0x4, fixed_abs, tag = 'smem constant byte address 0x4 - core index']
  #allocation1 [shape = 'u32[144,128]{1,0:T(1,128)}', space=vmem, size = 0x12000, scoped, tag = 'internal scratch']
  %s0 = inlined_call_operand.hbm [shape: bf16[8,32], index: 0, kind: input, shape index: {}]
  %s1 = inlined_call_operand.hbm [shape: bf16[32,256], index: 1, kind: input, shape index: {}]
  %s2 = inlined_call_operand.vmem [shape: f32[1,256], index: 2, kind: input, shape index: {}]
  %s3 = inlined_call_operand.hbm [shape: bf16[256,256], index: 3, kind: input, shape index: {}]
  %s4 = inlined_call_operand.vmem [shape: f32[1,256], index: 4, kind: input, shape index: {}]
  %s5 = inlined_call_operand.hbm [shape: bf16[256,256], index: 5, kind: input, shape index: {}]
  %s6 = inlined_call_operand.vmem [shape: f32[1,256], index: 6, kind: input, shape index: {}]
  %s7 = inlined_call_operand.hbm [shape: f32[8,384], index: 7, kind: output, shape index: {}]
  %s8 = sld [smem:[#allocation0]]
  $region54: #{tpu_custom_call.1} parent=0
    _
  %s10 = ssub.s32 1, %s8
  %s11 = scalar_select 0, %s10, %s8
  $region1: #{tpu_custom_call.1} parent=0
    #allocation2 [shape = 'u8[2048]{0}', space=vmem, size = 0x800, scoped, tag = 'input window, operand 0, single buffered']
    #allocation3 [shape = 's32[1]{0}', space=sflag, size = 0x4, scoped, tag = 'scoped memory for tpu_custom_call.1']
    #allocation4 [shape = 's32[1]{0}', space=sflag, size = 0x4, scoped, tag = 'scoped memory for tpu_custom_call.1']
    #allocation5 [shape = 'u8[16384]{0}', space=vmem, size = 0x4000, scoped, tag = 'input window, operand 1, single buffered']
    #allocation6 [shape = 's32[1]{0}', space=sflag, size = 0x4, scoped, tag = 'scoped memory for tpu_custom_call.1']
    #allocation7 [shape = 'u8[131072]{0}', space=vmem, size = 0x20000, scoped, tag = 'input window, operand 3, single buffered']
    #allocation8 [shape = 'u8[131072]{0}', space=vmem, size = 0x20000, scoped, tag = 'input window, operand 5, single buffered']
    #allocation9 [shape = 's32[1]{0}', space=sflag, size = 0x4, scoped, tag = 'scoped memory for tpu_custom_call.1']
    #allocation10 [shape = 'u8[12288]{0}', space=vmem, size = 0x3000, scoped, tag = 'output window, operand 0, single buffered']
    %12 = vsyncpa [#allocation3], 0
    %13 = vsyncpa [#allocation6], 0
    %14 = vsyncpa [#allocation9], 0
    %15 = vsyncpa [#allocation4], 0
    // Predicated region
    $region2: #{tpu_custom_call.1} parent=1 // pred_check
      _
    $region3: #{tpu_custom_call.1} parent=1 // pred_check_branch
      %17 = sbr.rel (0) target = $region5
    $region4: #{tpu_custom_call.1} parent=1 // pred_region
      %s19 = ssub.s32 64, 64
      %20 = vsyncadd [#allocation3], %s19
      %s22 = sshll.u32 [#allocation2], 4
      %s23 = int_to_ptr.vmem [resolvable:$true] %s22
      %25 = dma.hbm_to_vmem [thread:$0]  %s0, 64, %s23, [#allocation3]
    $region5: #{tpu_custom_call.1} parent=1 // pred_fallthru
      _
    // Predicated region
    $region6: #{tpu_custom_call.1} parent=1 // pred_check
      _
    $region7: #{tpu_custom_call.1} parent=1 // pred_check_branch
      %27 = sbr.rel (0) target = $region9
    $region8: #{tpu_custom_call.1} parent=1 // pred_region
      %s29 = ssub.s32 512, 512
      %30 = vsyncadd [#allocation6], %s29
      %s31 = sshll.u32 [#allocation5], 4
      %s32 = int_to_ptr.vmem [resolvable:$true] %s31
      %37 = dma.hbm_to_vmem [thread:$0]  %s1, 512, %s32, [#allocation6], 128, 128, 8
    $region9: #{tpu_custom_call.1} parent=1 // pred_fallthru
      _
    // Predicated region
    $region10: #{tpu_custom_call.1} parent=1 // pred_check
      _
    $region11: #{tpu_custom_call.1} parent=1 // pred_check_branch
      %39 = sbr.rel (0) target = $region13
    $region12: #{tpu_custom_call.1} parent=1 // pred_region
      _
    $region13: #{tpu_custom_call.1} parent=1 // pred_fallthru
      _
    // Predicated region
    $region14: #{tpu_custom_call.1} parent=1 // pred_check
      _
    $region15: #{tpu_custom_call.1} parent=1 // pred_check_branch
      %41 = sbr.rel (0) target = $region17
    $region16: #{tpu_custom_call.1} parent=1 // pred_region
      %s43 = ssub.s32 4096, 4096
      %44 = vsyncadd [#allocation6], %s43
      %s45 = sshll.u32 [#allocation7], 4
      %s46 = int_to_ptr.vmem [resolvable:$true] %s45
      %51 = dma.hbm_to_vmem [thread:$0]  %s3, 4096, %s46, [#allocation6], 128, 128, 8
    $region17: #{tpu_custom_call.1} parent=1 // pred_fallthru
      _
    // Predicated region
    $region18: #{tpu_custom_call.1} parent=1 // pred_check
      _
    $region19: #{tpu_custom_call.1} parent=1 // pred_check_branch
      %53 = sbr.rel (0) target = $region21
    $region20: #{tpu_custom_call.1} parent=1 // pred_region
      _
    $region21: #{tpu_custom_call.1} parent=1 // pred_fallthru
      _
    // Predicated region
    $region22: #{tpu_custom_call.1} parent=1 // pred_check
      _
    $region23: #{tpu_custom_call.1} parent=1 // pred_check_branch
      %55 = sbr.rel (0) target = $region25
    $region24: #{tpu_custom_call.1} parent=1 // pred_region
      %s57 = ssub.s32 4096, 4096
      %58 = vsyncadd [#allocation9], %s57
      %s59 = sshll.u32 [#allocation8], 4
      %s60 = int_to_ptr.vmem [resolvable:$true] %s59
      %65 = dma.hbm_to_vmem [thread:$0]  %s5, 4096, %s60, [#allocation9], 128, 128, 8
    $region25: #{tpu_custom_call.1} parent=1 // pred_fallthru
      _
    // Predicated region
    $region26: #{tpu_custom_call.1} parent=1 // pred_check
      _
    $region27: #{tpu_custom_call.1} parent=1 // pred_check_branch
      %67 = sbr.rel (0) target = $region29
    $region28: #{tpu_custom_call.1} parent=1 // pred_region
      _
    $region29: #{tpu_custom_call.1} parent=1 // pred_fallthru
      _
    // Predicated region
    $region30: #{tpu_custom_call.1} parent=1 // pred_check
      _
    $region31: #{tpu_custom_call.1} parent=1 // pred_check_branch
      %69 = sbr.rel (0) target = $region33
    $region32: #{tpu_custom_call.1} parent=1 // pred_region
      %70 = dma.done [#allocation3], 64
    $region33: #{tpu_custom_call.1} parent=1 // pred_fallthru
      _
    // Predicated region
    $region34: #{tpu_custom_call.1} parent=1 // pred_check
      _
    $region35: #{tpu_custom_call.1} parent=1 // pred_check_branch
      %72 = sbr.rel (0) target = $region37
    $region36: #{tpu_custom_call.1} parent=1 // pred_region
      %73 = dma.done [#allocation6], 512
    $region37: #{tpu_custom_call.1} parent=1 // pred_fallthru
      _
    // Predicated region
    $region38: #{tpu_custom_call.1} parent=1 // pred_check
      _
    $region39: #{tpu_custom_call.1} parent=1 // pred_check_branch
      %75 = sbr.rel (0) target = $region41
    $region40: #{tpu_custom_call.1} parent=1 // pred_region
      %76 = dma.done [#allocation6], 4096
    $region41: #{tpu_custom_call.1} parent=1 // pred_fallthru
      _
    // Predicated region
    $region42: #{tpu_custom_call.1} parent=1 // pred_check
      _
    $region43: #{tpu_custom_call.1} parent=1 // pred_check_branch
      %78 = sbr.rel (0) target = $region45
    $region44: #{tpu_custom_call.1} parent=1 // pred_region
      %79 = dma.done [#allocation9], 4096
    $region45: #{tpu_custom_call.1} parent=1 // pred_fallthru
      _
    %v81 = vld [vmem:[#allocation2] sm:$0xf]
    %v82 = vld [vmem:[#allocation5] sm:$0xff]
    %v83 = vld [vmem:[#allocation5 + $0x8] sm:$0xff]
    %v84 = vld [vmem:[#allocation5 + $0x10] sm:$0xff]
    %v85 = vld [vmem:[#allocation5 + $0x18] sm:$0xff]
    %v86 = vld [vmem:[%s2] sm:$0x3]
    %v88 = vlaneseq
    %v89 = vshrl.u32 %v88, 7
    %v90 = vsub.s32 0, %v89
    %v91 = vrot.slane %v86, %v90
    %v92 = vlaneseq
    %v93 = vshrl.u32 %v92, 7
    %v94 = vsub.s32 1, %v93
    %v95 = vrot.slane %v86, %v94
    %v102 = vunpack.c.l.b16 %v82
    %v103 = vunpack.c.h.b16 %v82
    %v104 = vunpack.c.l.b16 %v83
    %v105 = vunpack.c.h.b16 %v83
    %v106 = vunpack.c.l.b16 %v84
    %v107 = vunpack.c.h.b16 %v84
    %v108 = vunpack.c.l.b16 %v85
    %v109 = vunpack.c.h.b16 %v85
    %v110 = vpack.c.b16 %v104, %v102
    %v111 = vpack.c.b16 %v105, %v103
    %v112 = vpack.c.b16 %v108, %v106
    %v113 = vpack.c.b16 %v109, %v107
    %vm118 = vcmask 261120
    %v120 = vsel %vm118, %v81, 0
    %122 = vmatprep.subr.bf16.mxu0 %v111
    %123 = vmatpush1.bf16.msra.mxu0 %v110
    %124 = vmatprep.subr.bf16.mxu0 %v113
    %125 = vmatpush1.bf16.msra.mxu0 %v112
    %126 = vmatprep.subr.bf16.mxu0 0
    %127 = vmatpush1.bf16.msra.mxu0 0
    %128 = vmatprep.subr.bf16.mxu0 0
    %129 = vmatpush1.bf16.msra.mxu0 0
    %130 = vmatprep.subr.bf16.mxu0 0
    %131 = vmatpush1.bf16.msra.mxu0 0
    %132 = vmatprep.subr.bf16.mxu0 0
    %133 = vmatpush1.bf16.msra.mxu0 0
    %134 = vmatprep.subr.bf16.mxu0 0
    %135 = vmatpush1.bf16.msra.mxu0 0
    %136 = vmatprep.subr.bf16.mxu0 0
    %137 = vmatpush1.bf16.msra.mxu0 0
    %138 = vmatprep.subr.bf16.mxu0 0
    %139 = vmatpush1.bf16.msra.mxu0 0
    %140 = vmatprep.subr.bf16.mxu0 0
    %141 = vmatpush1.bf16.msra.mxu0 0
    %142 = vmatprep.subr.bf16.mxu0 0
    %143 = vmatpush1.bf16.msra.mxu0 0
    %144 = vmatprep.subr.bf16.mxu0 0
    %145 = vmatpush1.bf16.msra.mxu0 0
    %146 = vmatprep.subr.bf16.mxu0 0
    %147 = vmatpush1.bf16.msra.mxu0 0
    %148 = vmatprep.subr.bf16.mxu0 0
    %149 = vmatpush1.bf16.msra.mxu0 0
    %150 = vmatprep.subr.bf16.mxu0 0
    %151 = vmatpush1.bf16.msra.mxu0 0
    %152 = vmatprep.subr.bf16.mxu0 0
    %153 = vmatpush1.bf16.msra.mxu0 0
    %154 = vmatprep.mubr.bf16.mxu0 0
    %155 = vmatmul.mubr.bf16.gmra.mrb[0].mxu0 %v120
    %v156 = vpop.f32.mrb[0].mxu0
    %v157 = vadd.f32 %v91, %v156
    %v158 = vpop.f32.mrb[0].mxu0
    %v159 = vadd.f32 %v95, %v158
    %v160 = vpop.f32.mrb[0].mxu0
    %v161 = vpop.f32.mrb[0].mxu0
    %162 = vdwg.mxu0
    %v163 = vmax.f32 %v157, 0.0
    %v164 = vmax.f32 %v159, 0.0
    %v165 = vpack.c.bf16 %v163, %v163
    %v166 = vpack.c.bf16 %v164, %v164
    %v167 = vld [vmem:[#allocation7] sm:$0xff]
    %v168 = vld [vmem:[#allocation7 + $0x8] sm:$0xff]
    %v169 = vld [vmem:[#allocation7 + $0x10] sm:$0xff]
    %v170 = vld [vmem:[#allocation7 + $0x18] sm:$0xff]
    %v171 = vld [vmem:[#allocation7 + $0x20] sm:$0xff]
    %v172 = vld [vmem:[#allocation7 + $0x28] sm:$0xff]
    %v173 = vld [vmem:[#allocation7 + $0x30] sm:$0xff]
    %v174 = vld [vmem:[#allocation7 + $0x38] sm:$0xff]
    %v175 = vld [vmem:[#allocation7 + $0x40] sm:$0xff]
    %v176 = vld [vmem:[#allocation7 + $0x48] sm:$0xff]
    %v177 = vld [vmem:[#allocation7 + $0x50] sm:$0xff]
    %v178 = vld [vmem:[#allocation7 + $0x58] sm:$0xff]
    %v179 = vld [vmem:[#allocation7 + $0x60] sm:$0xff]
    %v180 = vld [vmem:[#allocation7 + $0x68] sm:$0xff]
    %v181 = vld [vmem:[#allocation7 + $0x70] sm:$0xff]
    %v182 = vld [vmem:[#allocation7 + $0x78] sm:$0xff]
    %v183 = vld [vmem:[#allocation7 + $0x80] sm:$0xff]
    %v184 = vld [vmem:[#allocation7 + $0x88] sm:$0xff]
    %v185 = vld [vmem:[#allocation7 + $0x90] sm:$0xff]
    %v186 = vld [vmem:[#allocation7 + $0x98] sm:$0xff]
    %v187 = vld [vmem:[#allocation7 + $0xa0] sm:$0xff]
    %v188 = vld [vmem:[#allocation7 + $0xa8] sm:$0xff]
    %v189 = vld [vmem:[#allocation7 + $0xb0] sm:$0xff]
    %v190 = vld [vmem:[#allocation7 + $0xb8] sm:$0xff]
    %v191 = vld [vmem:[#allocation7 + $0xc0] sm:$0xff]
    %v192 = vld [vmem:[#allocation7 + $0xc8] sm:$0xff]
    %v193 = vld [vmem:[#allocation7 + $0xd0] sm:$0xff]
    %v194 = vld [vmem:[#allocation7 + $0xd8] sm:$0xff]
    %v195 = vld [vmem:[#allocation7 + $0xe0] sm:$0xff]
    %v196 = vld [vmem:[#allocation7 + $0xe8] sm:$0xff]
    %v197 = vld [vmem:[#allocation7 + $0xf0] sm:$0xff]
    %v198 = vld [vmem:[#allocation7 + $0xf8] sm:$0xff]
    %v199 = vld [vmem:[%s4] sm:$0x3]
    %v201 = vlaneseq
    %v202 = vshrl.u32 %v201, 7
    %v203 = vsub.s32 0, %v202
    %v204 = vrot.slane %v199, %v203
    %v205 = vlaneseq
    %v206 = vshrl.u32 %v205, 7
    %v207 = vsub.s32 1, %v206
    %v208 = vrot.slane %v199, %v207
    %v243 = vunpack.c.l.b16 %v167
    %v244 = vunpack.c.h.b16 %v167
    %v245 = vunpack.c.l.b16 %v168
    %v246 = vunpack.c.h.b16 %v168
    %v247 = vunpack.c.l.b16 %v169
    %v248 = vunpack.c.h.b16 %v169
    %v249 = vunpack.c.l.b16 %v170
    %v250 = vunpack.c.h.b16 %v170
    %v251 = vunpack.c.l.b16 %v171
    %v252 = vunpack.c.h.b16 %v171
    %v253 = vunpack.c.l.b16 %v172
    %v254 = vunpack.c.h.b16 %v172
    %v255 = vunpack.c.l.b16 %v173
    %v256 = vunpack.c.h.b16 %v173
    %v257 = vunpack.c.l.b16 %v174
    %v258 = vunpack.c.h.b16 %v174
    %v259 = vunpack.c.l.b16 %v175
    %v260 = vunpack.c.h.b16 %v175
    %v261 = vunpack.c.l.b16 %v176
    %v262 = vunpack.c.h.b16 %v176
    %v263 = vunpack.c.l.b16 %v177
    %v264 = vunpack.c.h.b16 %v177
    %v265 = vunpack.c.l.b16 %v178
    %v266 = vunpack.c.h.b16 %v178
    %v267 = vunpack.c.l.b16 %v179
    %v268 = vunpack.c.h.b16 %v179
    %v269 = vunpack.c.l.b16 %v180
    %v270 = vunpack.c.h.b16 %v180
    %v271 = vunpack.c.l.b16 %v181
    %v272 = vunpack.c.h.b16 %v181
    %v273 = vunpack.c.l.b16 %v182
    %v274 = vunpack.c.h.b16 %v182
    %v275 = vunpack.c.l.b16 %v183
    %v276 = vunpack.c.h.b16 %v183
    %v277 = vunpack.c.l.b16 %v184
    %v278 = vunpack.c.h.b16 %v184
    %v279 = vunpack.c.l.b16 %v185
    %v280 = vunpack.c.h.b16 %v185
    %v281 = vunpack.c.l.b16 %v186
    %v282 = vunpack.c.h.b16 %v186
    %v283 = vunpack.c.l.b16 %v187
    %v284 = vunpack.c.h.b16 %v187
    %v285 = vunpack.c.l.b16 %v188
    %v286 = vunpack.c.h.b16 %v188
    %v287 = vunpack.c.l.b16 %v189
    %v288 = vunpack.c.h.b16 %v189
    %v289 = vunpack.c.l.b16 %v190
    %v290 = vunpack.c.h.b16 %v190
    %v291 = vunpack.c.l.b16 %v191
    %v292 = vunpack.c.h.b16 %v191
    %v293 = vunpack.c.l.b16 %v192
    %v294 = vunpack.c.h.b16 %v192
    %v295 = vunpack.c.l.b16 %v193
    %v296 = vunpack.c.h.b16 %v193
    %v297 = vunpack.c.l.b16 %v194
    %v298 = vunpack.c.h.b16 %v194
    %v299 = vunpack.c.l.b16 %v195
    %v300 = vunpack.c.h.b16 %v195
    %v301 = vunpack.c.l.b16 %v196
    %v302 = vunpack.c.h.b16 %v196
    %v303 = vunpack.c.l.b16 %v197
    %v304 = vunpack.c.h.b16 %v197
    %v305 = vunpack.c.l.b16 %v198
    %v306 = vunpack.c.h.b16 %v198
    %v307 = vpack.c.b16 %v245, %v243
    %v308 = vpack.c.b16 %v246, %v244
    %v309 = vpack.c.b16 %v249, %v247
    %v310 = vpack.c.b16 %v250, %v248
    %v311 = vpack.c.b16 %v253, %v251
    %v312 = vpack.c.b16 %v254, %v252
    %v313 = vpack.c.b16 %v257, %v255
    %v314 = vpack.c.b16 %v258, %v256
    %v315 = vpack.c.b16 %v261, %v259
    %v316 = vpack.c.b16 %v262, %v260
    %v317 = vpack.c.b16 %v265, %v263
    %v318 = vpack.c.b16 %v266, %v264
    %v319 = vpack.c.b16 %v269, %v267
    %v320 = vpack.c.b16 %v270, %v268
    %v321 = vpack.c.b16 %v273, %v271
    %v322 = vpack.c.b16 %v274, %v272
    %v323 = vpack.c.b16 %v277, %v275
    %v324 = vpack.c.b16 %v278, %v276
    %v325 = vpack.c.b16 %v281, %v279
    %v326 = vpack.c.b16 %v282, %v280
    %v327 = vpack.c.b16 %v285, %v283
    %v328 = vpack.c.b16 %v286, %v284
    %v329 = vpack.c.b16 %v289, %v287
    %v330 = vpack.c.b16 %v290, %v288
    %v331 = vpack.c.b16 %v293, %v291
    %v332 = vpack.c.b16 %v294, %v292
    %v333 = vpack.c.b16 %v297, %v295
    %v334 = vpack.c.b16 %v298, %v296
    %v335 = vpack.c.b16 %v301, %v299
    %v336 = vpack.c.b16 %v302, %v300
    %v337 = vpack.c.b16 %v305, %v303
    %v338 = vpack.c.b16 %v306, %v304
    %371 = vmatprep.subr.bf16.mxu0 %v308
    %372 = vmatpush1.bf16.msra.mxu0 %v307
    %373 = vmatprep.subr.bf16.mxu0 %v310
    %374 = vmatpush1.bf16.msra.mxu0 %v309
    %375 = vmatprep.subr.bf16.mxu0 %v312
    %376 = vmatpush1.bf16.msra.mxu0 %v311
    %377 = vmatprep.subr.bf16.mxu0 %v314
    %378 = vmatpush1.bf16.msra.mxu0 %v313
    %379 = vmatprep.subr.bf16.mxu0 %v316
    %380 = vmatpush1.bf16.msra.mxu0 %v315
    %381 = vmatprep.subr.bf16.mxu0 %v318
    %382 = vmatpush1.bf16.msra.mxu0 %v317
    %383 = vmatprep.subr.bf16.mxu0 %v320
    %384 = vmatpush1.bf16.msra.mxu0 %v319
    %385 = vmatprep.subr.bf16.mxu0 %v322
    %386 = vmatpush1.bf16.msra.mxu0 %v321
    %387 = vmatprep.subr.bf16.mxu0 %v324
    %388 = vmatpush1.bf16.msra.mxu0 %v323
    %389 = vmatprep.subr.bf16.mxu0 %v326
    %390 = vmatpush1.bf16.msra.mxu0 %v325
    %391 = vmatprep.subr.bf16.mxu0 %v328
    %392 = vmatpush1.bf16.msra.mxu0 %v327
    %393 = vmatprep.subr.bf16.mxu0 %v330
    %394 = vmatpush1.bf16.msra.mxu0 %v329
    %395 = vmatprep.subr.bf16.mxu0 %v332
    %396 = vmatpush1.bf16.msra.mxu0 %v331
    %397 = vmatprep.subr.bf16.mxu0 %v334
    %398 = vmatpush1.bf16.msra.mxu0 %v333
    %399 = vmatprep.subr.bf16.mxu0 %v336
    %400 = vmatpush1.bf16.msra.mxu0 %v335
    %401 = vmatprep.subr.bf16.mxu0 %v338
    %402 = vmatpush1.bf16.msra.mxu0 %v337
    %403 = vmatprep.mubr.bf16.mxu0 %v166
    %404 = vmatmul.mubr.bf16.gmra.mrb[0].mxu0 %v165
    %v405 = vpop.f32.mrb[0].mxu0
    %v406 = vadd.f32 %v204, %v405
    %v407 = vpop.f32.mrb[0].mxu0
    %v408 = vadd.f32 %v208, %v407
    %v409 = vpop.f32.mrb[0].mxu0
    %v410 = vpop.f32.mrb[0].mxu0
    %411 = vdwg.mxu0
    %v412 = vmax.f32 %v406, 0.0
    %v413 = vmax.f32 %v408, 0.0
    %v414 = vpack.c.bf16 %v412, %v412
    %v415 = vpack.c.bf16 %v413, %v413
    %v416 = vld [vmem:[#allocation8] sm:$0xff]
    %v417 = vld [vmem:[#allocation8 + $0x8] sm:$0xff]
    %v418 = vld [vmem:[#allocation8 + $0x10] sm:$0xff]
    %v419 = vld [vmem:[#allocation8 + $0x18] sm:$0xff]
    %v420 = vld [vmem:[#allocation8 + $0x20] sm:$0xff]
    %v421 = vld [vmem:[#allocation8 + $0x28] sm:$0xff]
    %v422 = vld [vmem:[#allocation8 + $0x30] sm:$0xff]
    %v423 = vld [vmem:[#allocation8 + $0x38] sm:$0xff]
    %v424 = vld [vmem:[#allocation8 + $0x40] sm:$0xff]
    %v425 = vld [vmem:[#allocation8 + $0x48] sm:$0xff]
    %v426 = vld [vmem:[#allocation8 + $0x50] sm:$0xff]
    %v427 = vld [vmem:[#allocation8 + $0x58] sm:$0xff]
    %v428 = vld [vmem:[#allocation8 + $0x60] sm:$0xff]
    %v429 = vld [vmem:[#allocation8 + $0x68] sm:$0xff]
    %v430 = vld [vmem:[#allocation8 + $0x70] sm:$0xff]
    %v431 = vld [vmem:[#allocation8 + $0x78] sm:$0xff]
    %v432 = vld [vmem:[#allocation8 + $0x80] sm:$0xff]
    %v433 = vld [vmem:[#allocation8 + $0x88] sm:$0xff]
    %v434 = vld [vmem:[#allocation8 + $0x90] sm:$0xff]
    %v435 = vld [vmem:[#allocation8 + $0x98] sm:$0xff]
    %v436 = vld [vmem:[#allocation8 + $0xa0] sm:$0xff]
    %v437 = vld [vmem:[#allocation8 + $0xa8] sm:$0xff]
    %v438 = vld [vmem:[#allocation8 + $0xb0] sm:$0xff]
    %v439 = vld [vmem:[#allocation8 + $0xb8] sm:$0xff]
    %v440 = vld [vmem:[#allocation8 + $0xc0] sm:$0xff]
    %v441 = vld [vmem:[#allocation8 + $0xc8] sm:$0xff]
    %v442 = vld [vmem:[#allocation8 + $0xd0] sm:$0xff]
    %v443 = vld [vmem:[#allocation8 + $0xd8] sm:$0xff]
    %v444 = vld [vmem:[#allocation8 + $0xe0] sm:$0xff]
    %v445 = vld [vmem:[#allocation8 + $0xe8] sm:$0xff]
    %v446 = vld [vmem:[#allocation8 + $0xf0] sm:$0xff]
    %v447 = vld [vmem:[#allocation8 + $0xf8] sm:$0xff]
    %v448 = vld [vmem:[%s6] sm:$0x3]
    %v450 = vlaneseq
    %v451 = vshrl.u32 %v450, 7
    %v452 = vsub.s32 0, %v451
    %v453 = vrot.slane %v448, %v452
    %v454 = vlaneseq
    %v455 = vshrl.u32 %v454, 7
    %v456 = vsub.s32 1, %v455
    %v457 = vrot.slane %v448, %v456
    %v492 = vunpack.c.l.b16 %v416
    %v493 = vunpack.c.h.b16 %v416
    %v494 = vunpack.c.l.b16 %v417
    %v495 = vunpack.c.h.b16 %v417
    %v496 = vunpack.c.l.b16 %v418
    %v497 = vunpack.c.h.b16 %v418
    %v498 = vunpack.c.l.b16 %v419
    %v499 = vunpack.c.h.b16 %v419
    %v500 = vunpack.c.l.b16 %v420
    %v501 = vunpack.c.h.b16 %v420
    %v502 = vunpack.c.l.b16 %v421
    %v503 = vunpack.c.h.b16 %v421
    %v504 = vunpack.c.l.b16 %v422
    %v505 = vunpack.c.h.b16 %v422
    %v506 = vunpack.c.l.b16 %v423
    %v507 = vunpack.c.h.b16 %v423
    %v508 = vunpack.c.l.b16 %v424
    %v509 = vunpack.c.h.b16 %v424
    %v510 = vunpack.c.l.b16 %v425
    %v511 = vunpack.c.h.b16 %v425
    %v512 = vunpack.c.l.b16 %v426
    %v513 = vunpack.c.h.b16 %v426
    %v514 = vunpack.c.l.b16 %v427
    %v515 = vunpack.c.h.b16 %v427
    %v516 = vunpack.c.l.b16 %v428
    %v517 = vunpack.c.h.b16 %v428
    %v518 = vunpack.c.l.b16 %v429
    %v519 = vunpack.c.h.b16 %v429
    %v520 = vunpack.c.l.b16 %v430
    %v521 = vunpack.c.h.b16 %v430
    %v522 = vunpack.c.l.b16 %v431
    %v523 = vunpack.c.h.b16 %v431
    %v524 = vunpack.c.l.b16 %v432
    %v525 = vunpack.c.h.b16 %v432
    %v526 = vunpack.c.l.b16 %v433
    %v527 = vunpack.c.h.b16 %v433
    %v528 = vunpack.c.l.b16 %v434
    %v529 = vunpack.c.h.b16 %v434
    %v530 = vunpack.c.l.b16 %v435
    %v531 = vunpack.c.h.b16 %v435
    %v532 = vunpack.c.l.b16 %v436
    %v533 = vunpack.c.h.b16 %v436
    %v534 = vunpack.c.l.b16 %v437
    %v535 = vunpack.c.h.b16 %v437
    %v536 = vunpack.c.l.b16 %v438
    %v537 = vunpack.c.h.b16 %v438
    %v538 = vunpack.c.l.b16 %v439
    %v539 = vunpack.c.h.b16 %v439
    %v540 = vunpack.c.l.b16 %v440
    %v541 = vunpack.c.h.b16 %v440
    %v542 = vunpack.c.l.b16 %v441
    %v543 = vunpack.c.h.b16 %v441
    %v544 = vunpack.c.l.b16 %v442
    %v545 = vunpack.c.h.b16 %v442
    %v546 = vunpack.c.l.b16 %v443
    %v547 = vunpack.c.h.b16 %v443
    %v548 = vunpack.c.l.b16 %v444
    %v549 = vunpack.c.h.b16 %v444
    %v550 = vunpack.c.l.b16 %v445
    %v551 = vunpack.c.h.b16 %v445
    %v552 = vunpack.c.l.b16 %v446
    %v553 = vunpack.c.h.b16 %v446
    %v554 = vunpack.c.l.b16 %v447
    %v555 = vunpack.c.h.b16 %v447
    %v556 = vpack.c.b16 %v494, %v492
    %v557 = vpack.c.b16 %v495, %v493
    %v558 = vpack.c.b16 %v498, %v496
    %v559 = vpack.c.b16 %v499, %v497
    %v560 = vpack.c.b16 %v502, %v500
    %v561 = vpack.c.b16 %v503, %v501
    %v562 = vpack.c.b16 %v506, %v504
    %v563 = vpack.c.b16 %v507, %v505
    %v564 = vpack.c.b16 %v510, %v508
    %v565 = vpack.c.b16 %v511, %v509
    %v566 = vpack.c.b16 %v514, %v512
    %v567 = vpack.c.b16 %v515, %v513
    %v568 = vpack.c.b16 %v518, %v516
    %v569 = vpack.c.b16 %v519, %v517
    %v570 = vpack.c.b16 %v522, %v520
    %v571 = vpack.c.b16 %v523, %v521
    %v572 = vpack.c.b16 %v526, %v524
    %v573 = vpack.c.b16 %v527, %v525
    %v574 = vpack.c.b16 %v530, %v528
    %v575 = vpack.c.b16 %v531, %v529
    %v576 = vpack.c.b16 %v534, %v532
    %v577 = vpack.c.b16 %v535, %v533
    %v578 = vpack.c.b16 %v538, %v536
    %v579 = vpack.c.b16 %v539, %v537
    %v580 = vpack.c.b16 %v542, %v540
    %v581 = vpack.c.b16 %v543, %v541
    %v582 = vpack.c.b16 %v546, %v544
    %v583 = vpack.c.b16 %v547, %v545
    %v584 = vpack.c.b16 %v550, %v548
    %v585 = vpack.c.b16 %v551, %v549
    %v586 = vpack.c.b16 %v554, %v552
    %v587 = vpack.c.b16 %v555, %v553
    %620 = vmatprep.subr.bf16.mxu0 %v557
    %621 = vmatpush1.bf16.msra.mxu0 %v556
    %622 = vmatprep.subr.bf16.mxu0 %v559
    %623 = vmatpush1.bf16.msra.mxu0 %v558
    %624 = vmatprep.subr.bf16.mxu0 %v561
    %625 = vmatpush1.bf16.msra.mxu0 %v560
    %626 = vmatprep.subr.bf16.mxu0 %v563
    %627 = vmatpush1.bf16.msra.mxu0 %v562
    %628 = vmatprep.subr.bf16.mxu0 %v565
    %629 = vmatpush1.bf16.msra.mxu0 %v564
    %630 = vmatprep.subr.bf16.mxu0 %v567
    %631 = vmatpush1.bf16.msra.mxu0 %v566
    %632 = vmatprep.subr.bf16.mxu0 %v569
    %633 = vmatpush1.bf16.msra.mxu0 %v568
    %634 = vmatprep.subr.bf16.mxu0 %v571
    %635 = vmatpush1.bf16.msra.mxu0 %v570
    %636 = vmatprep.subr.bf16.mxu0 %v573
    %637 = vmatpush1.bf16.msra.mxu0 %v572
    %638 = vmatprep.subr.bf16.mxu0 %v575
    %639 = vmatpush1.bf16.msra.mxu0 %v574
    %640 = vmatprep.subr.bf16.mxu0 %v577
    %641 = vmatpush1.bf16.msra.mxu0 %v576
    %642 = vmatprep.subr.bf16.mxu0 %v579
    %643 = vmatpush1.bf16.msra.mxu0 %v578
    %644 = vmatprep.subr.bf16.mxu0 %v581
    %645 = vmatpush1.bf16.msra.mxu0 %v580
    %646 = vmatprep.subr.bf16.mxu0 %v583
    %647 = vmatpush1.bf16.msra.mxu0 %v582
    %648 = vmatprep.subr.bf16.mxu0 %v585
    %649 = vmatpush1.bf16.msra.mxu0 %v584
    %650 = vmatprep.subr.bf16.mxu0 %v587
    %651 = vmatpush1.bf16.msra.mxu0 %v586
    %652 = vmatprep.mubr.bf16.mxu0 %v415
    %653 = vmatmul.mubr.bf16.gmra.mrb[0].mxu0 %v414
    %v654 = vpop.f32.mrb[0].mxu0
    %v655 = vadd.f32 %v453, %v654
    %v656 = vpop.f32.mrb[0].mxu0
    %v657 = vadd.f32 %v457, %v656
    %v658 = vpop.f32.mrb[0].mxu0
    %v659 = vpop.f32.mrb[0].mxu0
    %660 = vdwg.mxu0
    %v661 = vtanh.pop %v657
    %v662 = vadd.f32 %v661, 1.0
    %v663 = vmul.f32 %v662, 3.5
    %v664 = vadd.f32 %v663, -5.0
    %v665 = vmul.f32 %v664, 1.442695
    %v666 = vpow.pop %v665
    %667 = vst [vmem:[#allocation10] sm:$0xff] %v655
    %668 = vst [vmem:[#allocation10 + $0x8] sm:$0xff] %v666
    %v669 = vtanh.pop %v655
    %670 = vst [vmem:[#allocation10 + $0x10] sm:$0xff] %v669
    // Predicated region
    $region46: #{tpu_custom_call.1} parent=1 // pred_check
      _
    $region47: #{tpu_custom_call.1} parent=1 // pred_check_branch
      %672 = sbr.rel (0) target = $region49
    $region48: #{tpu_custom_call.1} parent=1 // pred_region
      %s674 = ssub.s32 384, 384
      %675 = vsyncadd [#allocation4], %s674
      %s677 = sshll.u32 [#allocation10], 4
      %s678 = int_to_ptr.vmem [resolvable:$true] %s677
      %680 = dma.vmem_to_hbm [thread:$0]  %s678, 384, %s7, [#allocation4]
    $region49: #{tpu_custom_call.1} parent=1 // pred_fallthru
      _
    // Predicated region
    $region50: #{tpu_custom_call.1} parent=1 // pred_check
      _
    $region51: #{tpu_custom_call.1} parent=1 // pred_check_branch
      %682 = sbr.rel (0) target = $region53
    $region52: #{tpu_custom_call.1} parent=1 // pred_region
      %683 = dma.done [#allocation4], 384
    $region53: #{tpu_custom_call.1} parent=1 // pred_fallthru
      _
    %684 = vsyncpa [#allocation3], 1
    %685 = vsyncpa [#allocation6], 1
    %686 = vsyncpa [#allocation9], 1
    %687 = vsyncpa [#allocation4], 1

</llo_original>
